<compile_context>
chip_gen: v6e
topology: v6e:2x2x1
jax: 0.10.0
libtpu: 0.0.40
codegen_flags: <defaults>
</compile_context>

<pallas_src>
import jax
import jax.numpy as jnp
from jax.experimental import pallas as pl
from jax.experimental.pallas import tpu as pltpu


def _round_up(n, m):
    return ((n + m - 1) // m) * m


def _vmem_capacity_bytes():
    try:
        return int(pltpu.get_tpu_info().vmem_capacity_bytes)
    except Exception:
        return 64 * 1024 * 1024  # conservative (v7x-sized) fallback


def _pick_tile_rows(batch, d, vmem_cap):
    """Rows per x tile: big enough to sit near HBM roofline, small enough for VMEM."""
    per_buf = vmem_cap // 8                      # ~8 MiB (v7x) / ~16 MiB (v5e/v6e)
    tb = ((per_buf // (4 * d)) // 128) * 128     # f32 rows per buffer, lane-aligned
    tb = max(tb, 512)                            # amortize ~0.35us/grid-step overhead
    # Hard safety cap: the two pipelined x buffers must stay well inside VMEM
    # even for very wide D (this kernel does no K-tiling).
    cap = ((vmem_cap // 3) // (4 * d) // 128) * 128
    tb = min(tb, max(cap, 128))
    if tb >= batch:
        if batch > 256:
            # Split into >=2 tiles so both v7x TensorCores get work.
            tb = _round_up(-(-batch // 2), 128)
        else:
            # Tiny batch: single tile, sublane-aligned.
            tb = _round_up(batch, 8)
    return tb


def _scorecard_kernel(x_ref, w_ref, b_ref, o_ref):
    # x_ref: (TB, D)  VMEM batch tile (streamed LHS, K in lanes — MXU native)
    # w_ref: (D, 1)   VMEM weight column, resident across the grid
    # b_ref: (1,)     SMEM bias scalar
    # o_ref: (TB, 1)  VMEM scores for this tile
    scores = jnp.dot(x_ref[...], w_ref[...],
                     preferred_element_type=jnp.float32)      # (TB, 1) f32
    o_ref[...] = (scores + b_ref[0]).astype(o_ref.dtype)


def scorecard_forward(x, weight, bias, *, tb=None):
    """y = x @ weight.T + bias, matching nn.Linear(input_dim, 1).

    x:      (B, D) float32
    weight: (1, D) float32  (PyTorch Linear weight layout)
    bias:   (1,)   float32
    returns (B, 1) float32
    """
    B, D = x.shape
    vmem_cap = _vmem_capacity_bytes()

    if tb is None:
        tb = _pick_tile_rows(B, D, vmem_cap)

    num_tiles = pl.cdiv(B, tb)
    w_col = jnp.reshape(weight, (D, 1))

    x_buf_bytes = tb * D * 4
    vmem_limit = 2 * x_buf_bytes + (16 << 20)          # double-buffered x + headroom
    vmem_limit = min(vmem_limit, int(vmem_cap * 0.7))
    vmem_limit = max(vmem_limit, 32 << 20)

    out = pl.pallas_call(
        _scorecard_kernel,
        out_shape=jax.ShapeDtypeStruct((B, 1), x.dtype),
        grid=(num_tiles,),
        in_specs=[
            pl.BlockSpec((tb, D), lambda i: (i, 0)),             # streamed x tile
            pl.BlockSpec((D, 1), lambda i: (0, 0)),              # resident weight col
            pl.BlockSpec(memory_space=pltpu.MemorySpace.SMEM),   # bias scalar
        ],
        out_specs=pl.BlockSpec((tb, 1), lambda i: (i, 0)),
        compiler_params=pltpu.CompilerParams(
            dimension_semantics=("parallel",),
            vmem_limit_bytes=vmem_limit,
        ),
        cost_estimate=pl.CostEstimate(
            flops=2 * B * D,
            transcendentals=0,
            bytes_accessed=(B * D + D + B + 1) * 4,
        ),
    )(x, w_col, bias)

    return out


if __name__ == "__main__":
    # Small, deterministic example consistent with ScoreCard(input_dim=32)
    batch, input_dim = 8, 32

    key = jax.random.PRNGKey(0)
    kx, kw, kb = jax.random.split(key, 3)

    x = jax.random.normal(kx, (batch, input_dim), dtype=jnp.float32)

    # Deterministic parameter init (PyTorch Linear-style uniform bound)
    bound = 1.0 / (input_dim ** 0.5)
    weight = jax.random.uniform(kw, (1, input_dim), dtype=jnp.float32,
                                minval=-bound, maxval=bound)
    bias = jax.random.uniform(kb, (1,), dtype=jnp.float32,
                              minval=-bound, maxval=bound)

    y = jax.block_until_ready(scorecard_forward(x, weight, bias))
    y_ref = x @ weight.T + bias
    assert y.shape == (batch, 1)
    assert jnp.allclose(y, y_ref, atol=1e-5, rtol=1e-5)

    # Exercise the multi-tile path with a partial (masked) last tile, no padding.
    B2, D2 = 300, 256
    k2x, k2w, k2b = jax.random.split(jax.random.PRNGKey(1), 3)
    x2 = jax.random.normal(k2x, (B2, D2), dtype=jnp.float32)
    w2 = 0.05 * jax.random.normal(k2w, (1, D2), dtype=jnp.float32)
    b2 = jax.random.normal(k2b, (1,), dtype=jnp.float32)

    y2 = jax.block_until_ready(scorecard_forward(x2, w2, b2, tb=128))
    y2_ref = x2 @ w2.T + b2
    assert y2.shape == (B2, 1)
    assert jnp.allclose(y2, y2_ref, atol=1e-3, rtol=1e-3)

    # Auto-picked tile path (B > 256 forces >=2 tiles for v7x's two TCs).
    y3 = jax.block_until_ready(scorecard_forward(x2, w2, b2))
    assert jnp.allclose(y3, y2_ref, atol=1e-3, rtol=1e-3)

    print("KERNEL_OK")
</pallas_src>

<mosaic_0001>
module attributes {stable_mosaic.version = 11 : i64} {
  func.func @_scorecard_kernel(%arg0: i32, %arg1: memref<8x32xf32, #tpu.memory_space<vmem>>, %arg2: memref<32x1xf32, #tpu.memory_space<vmem>>, %arg3: memref<1xf32, #tpu.memory_space<smem>>, %arg4: memref<8x1xf32, #tpu.memory_space<vmem>>) attributes {dimension_semantics = [#tpu.dimension_semantics<parallel>], iteration_bounds = array<i64: 1>, scalar_prefetch = 0 : i64, scratch_operands = 0 : i64, tpu.core_type = #tpu.core_type<tc>, window_params = [{transform_indices = @transform_0, window_bounds = array<i64: 8, 32>}, {pipeline_mode = #tpu.pipeline_mode<synchronous>, transform_indices = @transform_1, window_bounds = array<i64: 32, 1>}, {transform_indices = @transform_2, window_bounds = array<i64: 1>}, {transform_indices = @transform_3, window_bounds = array<i64: 8, 1>}]} {
    %c0 = arith.constant 0 : index
    %c0_0 = arith.constant 0 : index
    %0 = vector.load %arg1[%c0, %c0_0] : memref<8x32xf32, #tpu.memory_space<vmem>>, vector<8x32xf32>
    %c0_1 = arith.constant 0 : index
    %c0_2 = arith.constant 0 : index
    %1 = vector.load %arg2[%c0_1, %c0_2] : memref<32x1xf32, #tpu.memory_space<vmem>>, vector<32x1xf32>
    %cst = arith.constant dense<0.000000e+00> : vector<8x1xf32>
    %2 = tpu.matmul %0, %1, %cst {dimension_numbers = #tpu.dot_dimension_numbers<[1], [0], [0], [1], [0, 0, 1, 1], [], []>} : vector<8x32xf32>, vector<32x1xf32>, vector<8x1xf32> -> vector<8x1xf32>
    %c0_3 = arith.constant 0 : index
    %3 = memref.load %arg3[%c0_3] : memref<1xf32, #tpu.memory_space<smem>>
    %4 = vector.broadcast %3 : f32 to vector<8x1xf32>
    %5 = arith.addf %2, %4 : vector<8x1xf32>
    %c0_4 = arith.constant 0 : index
    %c0_5 = arith.constant 0 : index
    %6 = vector.load %arg4[%c0_4, %c0_5] : memref<8x1xf32, #tpu.memory_space<vmem>>, vector<8x1xf32>
    tpu.vector_store %arg4[%c0_4, %c0_5], %5 {strides = array<i32>} : memref<8x1xf32, #tpu.memory_space<vmem>>, vector<8x1xf32>,
    return
  }
  func.func @transform_0(%arg0: i32) -> (i32, i32) {
    %c0_i32 = arith.constant 0 : i32
    %c0_i32_0 = arith.constant 0 : i32
    return %arg0, %c0_i32 : i32, i32
  }
  func.func @transform_1(%arg0: i32) -> (i32, i32) {
    %c0_i32 = arith.constant 0 : i32
    %c0_i32_0 = arith.constant 0 : i32
    %c0_i32_1 = arith.constant 0 : i32
    return %c0_i32, %c0_i32_0 : i32, i32
  }
  func.func @transform_2(%arg0: i32) -> i32 {
    %c0_i32 = arith.constant 0 : i32
    %c0_i32_0 = arith.constant 0 : i32
    return %c0_i32 : i32
  }
  func.func @transform_3(%arg0: i32) -> (i32, i32) {
    %c0_i32 = arith.constant 0 : i32
    %c0_i32_0 = arith.constant 0 : i32
    return %arg0, %c0_i32 : i32, i32
  }
}

</mosaic_0001>

<llo_original>
// kernel: tpu_custom_call.1
$region0: #{tpu_custom_call.1}
  #allocation0 [shape = 'u32[]', space=smem, size = 0x4, offset = 0x4, fixed_abs, tag = 'smem constant byte address 0x4 - core index']
  #allocation1 [shape = 'u32[144,128]{1,0:T(1,128)}', space=vmem, size = 0x12000, scoped, tag = 'internal scratch']
  #allocation2 [shape = 'f32[1]{0:T(128)S(6)}', space=smem, size = 0x200, scoped, tag = 'scoped memory for tpu_custom_call.1']
  %s0 = inlined_call_operand.vmem [shape: f32[8,32], index: 0, kind: input, shape index: {}]
  %s1 = inlined_call_operand.vmem [shape: f32[32,1], index: 1, kind: input, shape index: {}]
  %s2 = inlined_call_operand.<no memory space> [shape: f32[1], index: 2, kind: input, shape index: {}]
  %s3 = inlined_call_operand.vmem [shape: f32[8,1], index: 3, kind: output, shape index: {}]
  %s4 = sld [smem:[#allocation0]]
  $region22: #{tpu_custom_call.1} parent=0
    _
  %s6 = ssub.s32 1, %s4
  %s7 = scalar_select 0, %s6, %s4
  %8 = sst [smem:[#allocation2]] %s2
  // Predicated region
  $region2: #{tpu_custom_call.1} parent=0 // pred_check
    _
  $region3: #{tpu_custom_call.1} parent=0 // pred_check_branch
    %10 = sbr.rel (0) target = $region5
  $region4: #{tpu_custom_call.1} parent=0 // pred_region
    _
  $region5: #{tpu_custom_call.1} parent=0 // pred_fallthru
    _
  // Predicated region
  $region6: #{tpu_custom_call.1} parent=0 // pred_check
    _
  $region7: #{tpu_custom_call.1} parent=0 // pred_check_branch
    %12 = sbr.rel (0) target = $region9
  $region8: #{tpu_custom_call.1} parent=0 // pred_region
    _
  $region9: #{tpu_custom_call.1} parent=0 // pred_fallthru
    _
  // Predicated region
  $region10: #{tpu_custom_call.1} parent=0 // pred_check
    _
  $region11: #{tpu_custom_call.1} parent=0 // pred_check_branch
    %14 = sbr.rel (0) target = $region13
  $region12: #{tpu_custom_call.1} parent=0 // pred_region
    _
  $region13: #{tpu_custom_call.1} parent=0 // pred_fallthru
    _
  %v15 = vld [vmem:[%s0] sm:$0xff]
  %v16 = vld [vmem:[%s1] sm:$0xff]
  %v17 = vld [vmem:[%s1 + $0x8] sm:$0xff]
  %v18 = vld [vmem:[%s1 + $0x10] sm:$0xff]
  %v19 = vld [vmem:[%s1 + $0x18] sm:$0xff]
  %s20 = sld [smem:[#allocation2]]
  %v21 = vstv %s20
  %vm22 = vcmask 261120
  %v24 = vsel %vm22, %v15, 0
  %26 = vmatprep.subr.mxu0 0.0
  %27 = vmatpush1.msra.mxu0 0.0
  %28 = vmatprep.subr.mxu0 0.0
  %29 = vmatpush1.msra.mxu0 0.0
  %30 = vmatprep.subr.mxu0 0.0
  %31 = vmatpush1.msra.mxu0 0.0
  %32 = vmatprep.subr.mxu0 0.0
  %33 = vmatpush1.msra.mxu0 0.0
  %34 = vmatprep.subr.mxu0 0.0
  %35 = vmatpush1.msra.mxu0 0.0
  %36 = vmatprep.subr.mxu0 0.0
  %37 = vmatpush1.msra.mxu0 0.0
  %38 = vmatprep.subr.mxu0 0.0
  %39 = vmatpush1.msra.mxu0 0.0
  %40 = vmatprep.subr.mxu0 0.0
  %41 = vmatpush1.msra.mxu0 0.0
  %42 = vmatprep.subr.mxu0 0.0
  %43 = vmatpush1.msra.mxu0 0.0
  %44 = vmatprep.subr.mxu0 0.0
  %45 = vmatpush1.msra.mxu0 0.0
  %46 = vmatprep.subr.mxu0 0.0
  %47 = vmatpush1.msra.mxu0 0.0
  %48 = vmatprep.subr.mxu0 0.0
  %49 = vmatpush1.msra.mxu0 0.0
  %50 = vmatprep.subr.mxu0 0.0
  %51 = vmatpush1.msra.mxu0 %v19
  %52 = vmatprep.subr.mxu0 0.0
  %53 = vmatpush1.msra.mxu0 %v18
  %54 = vmatprep.subr.mxu0 0.0
  %55 = vmatpush1.msra.mxu0 %v17
  %56 = vmatprep.subr.mxu0 0.0
  %57 = vmatpush1.msra.mxu0 %v16
  %58 = vmatprep.subr.mxu0 0.0
  %59 = vmatpush2.msra.mxu0 0.0
  %60 = vmatprep.subr.mxu0 0.0
  %61 = vmatpush2.msra.mxu0 0.0
  %62 = vmatprep.subr.mxu0 0.0
  %63 = vmatpush2.msra.mxu0 0.0
  %64 = vmatprep.subr.mxu0 0.0
  %65 = vmatpush2.msra.mxu0 0.0
  %66 = vmatprep.subr.mxu0 0.0
  %67 = vmatpush2.msra.mxu0 0.0
  %68 = vmatprep.subr.mxu0 0.0
  %69 = vmatpush2.msra.mxu0 0.0
  %70 = vmatprep.subr.mxu0 0.0
  %71 = vmatpush2.msra.mxu0 0.0
  %72 = vmatprep.subr.mxu0 0.0
  %73 = vmatpush2.msra.mxu0 0.0
  %74 = vmatprep.subr.mxu0 0.0
  %75 = vmatpush2.msra.mxu0 0.0
  %76 = vmatprep.subr.mxu0 0.0
  %77 = vmatpush2.msra.mxu0 0.0
  %78 = vmatprep.subr.mxu0 0.0
  %79 = vmatpush2.msra.mxu0 0.0
  %80 = vmatprep.subr.mxu0 0.0
  %81 = vmatpush2.msra.mxu0 0.0
  %82 = vmatprep.subr.mxu0 0.0
  %83 = vmatpush2.msra.mxu0 0.0
  %84 = vmatprep.subr.mxu0 0.0
  %85 = vmatpush2.msra.mxu0 0.0
  %86 = vmatprep.subr.mxu0 0.0
  %87 = vmatpush2.msra.mxu0 0.0
  %88 = vmatprep.subr.mxu0 0.0
  %89 = vmatpush2.msra.mxu0 0.0
  %90 = vmatprep.mubr.f32.mxu0 0.0
  %91 = vmatmul.mubr.f32.gmra.mxu0 %v24
  %v92 = vpop.f32.mrf.mxu0
  %v93 = vadd.f32 %v21, %v92
  %v94 = vpop.f32.mrf.mxu0
  %95 = vdwg.mxu0
  %vm96 = vcmask 7168
  %97 = vst.msk [vmem:[%s3] sm:$0xff] %vm96, %v93
  // Predicated region
  $region14: #{tpu_custom_call.1} parent=0 // pred_check
    _
  $region15: #{tpu_custom_call.1} parent=0 // pred_check_branch
    %99 = sbr.rel (0) target = $region17
  $region16: #{tpu_custom_call.1} parent=0 // pred_region
    _
  $region17: #{tpu_custom_call.1} parent=0 // pred_fallthru
    _
  // Predicated region
  $region18: #{tpu_custom_call.1} parent=0 // pred_check
    _
  $region19: #{tpu_custom_call.1} parent=0 // pred_check_branch
    %101 = sbr.rel (0) target = $region21
  $region20: #{tpu_custom_call.1} parent=0 // pred_region
    _
  $region21: #{tpu_custom_call.1} parent=0 // pred_fallthru
    _

</llo_original>
